<compile_context>
chip_gen: v7x
topology: tpu7x:2x2x1
jax: 0.10.0
libtpu: 0.0.40
codegen_flags: <defaults>
</compile_context>

<pallas_src>
import jax
import jax.numpy as jnp
from jax.experimental import pallas as pl
from jax.experimental.pallas import tpu as pltpu

_MAX_INFLIGHT_DMAS = 8


def _dma_identity_kernel(x_ref, o_ref, sems):
    """Identity copy: chunked HBM->HBM DMAs, all started, then drained."""
    n_chunks = x_ref.shape[0]
    copies = [
        pltpu.make_async_copy(x_ref.at[c], o_ref.at[c], sems.at[c])
        for c in range(n_chunks)
    ]
    for cp in copies:   # put every chunk DMA in flight
        cp.start()
    for cp in copies:   # drain
        cp.wait()


def _num_chunks(leading_dim: int) -> int:
    """Small number of equal chunks along the leading axis (for DMA overlap)."""
    for c in (_MAX_INFLIGHT_DMAS, 4, 2):
        if leading_dim % c == 0:
            return c
    return 1


def pallas_reshape(x, shape):
    """Equivalent of torch.Tensor.view(shape) (row-major / C-contiguous)."""
    # The view itself is metadata-only; let XLA handle it outside the kernel.
    y = jnp.reshape(x, shape)
    if y.size == 0:
        return y

    # Add / split a leading "chunk" axis so the kernel can keep several
    # HBM->HBM DMAs in flight.  Splitting leading (non-tiled) dims does not
    # change the TPU physical layout, so this reshape is free.
    if y.ndim >= 2:
        lead = y.shape[0]
        nch = _num_chunks(lead)
        yc = y.reshape((nch, lead // nch) + y.shape[1:])
    else:
        nch = 1
        yc = y.reshape((1,) + y.shape)

    out = pl.pallas_call(
        _dma_identity_kernel,
        out_shape=jax.ShapeDtypeStruct(yc.shape, yc.dtype),
        # Both operands stay in HBM: no auto-pipelining, no VMEM round trip.
        in_specs=[pl.BlockSpec(memory_space=pl.ANY)],
        out_specs=pl.BlockSpec(memory_space=pl.ANY),
        scratch_shapes=[pltpu.SemaphoreType.DMA((nch,))],
    )(yc)

    # Undo the chunk-axis split (metadata-only).
    return out.reshape(y.shape)


class Reshape:
    """JAX/Pallas mirror of the PyTorch Reshape module."""

    def __init__(self, *args):
        self.shape = args

    def __call__(self, x):
        return pallas_reshape(x, self.shape)


if __name__ == "__main__":
    key = jax.random.PRNGKey(0)
    N, C, H, W = 2, 4, 16, 16
    x = jax.random.normal(key, (N, C, H, W), dtype=jnp.float32)

    # Reshape(2, 1024): view NCHW tensor as (N, C*H*W), matching
    # torch.Tensor.view semantics (row-major contiguity).
    mod = Reshape(N, C * H * W)
    y = jax.block_until_ready(mod(x))

    # correctness check against plain-JAX reshape (== torch .view for
    # contiguous row-major data)
    ref = x.reshape(N, C * H * W)
    assert y.shape == (N, C * H * W)
    assert y.dtype == x.dtype
    assert bool(jnp.array_equal(y, ref))

    print("KERNEL_OK")
</pallas_src>

<mosaic_0001>
module attributes {stable_mosaic.version = 11 : i64} {
  func.func @_dma_identity_kernel(%arg0: memref<2x1x1024xf32, #tpu.memory_space<any>>, %arg1: memref<2x1x1024xf32, #tpu.memory_space<any>>, %arg2: memref<2x!tpu.dma_semaphore, #tpu.memory_space<semaphore_mem>>) attributes {dimension_semantics = [], scalar_prefetch = 0 : i64, scratch_operands = 1 : i64, tpu.core_type = #tpu.core_type<tc>} {
    %c0_i32 = arith.constant 0 : i32
    %c0_i32_0 = arith.constant 0 : i32
    %c0_i32_1 = arith.constant 0 : i32
    %c0_i32_2 = arith.constant 0 : i32
    %c0_i32_3 = arith.constant 0 : i32
    %0 = tpu.memref_slice %arg0[%c0_i32, %c0_i32_2, %c0_i32_3] : memref<2x1x1024xf32, #tpu.memory_space<any>> -> memref<1x1x1024xf32, #tpu.memory_space<any>>
    %1 = tpu.memref_squeeze %0 : memref<1x1x1024xf32, #tpu.memory_space<any>> -> memref<1x1024xf32, #tpu.memory_space<any>>
    %c0_i32_4 = arith.constant 0 : i32
    %c0_i32_5 = arith.constant 0 : i32
    %2 = tpu.memref_slice %arg1[%c0_i32_0, %c0_i32_4, %c0_i32_5] : memref<2x1x1024xf32, #tpu.memory_space<any>> -> memref<1x1x1024xf32, #tpu.memory_space<any>>
    %3 = tpu.memref_squeeze %2 : memref<1x1x1024xf32, #tpu.memory_space<any>> -> memref<1x1024xf32, #tpu.memory_space<any>>
    %4 = tpu.memref_slice %arg2[%c0_i32_1] : memref<2x!tpu.dma_semaphore, #tpu.memory_space<semaphore_mem>> -> memref<1x!tpu.dma_semaphore, #tpu.memory_space<semaphore_mem>>
    %5 = tpu.memref_squeeze %4 : memref<1x!tpu.dma_semaphore, #tpu.memory_space<semaphore_mem>> -> memref<!tpu.dma_semaphore, #tpu.memory_space<semaphore_mem>>
    tpu.enqueue_dma source(%1 : memref<1x1024xf32, #tpu.memory_space<any>>) target(%3 : memref<1x1024xf32, #tpu.memory_space<any>>) target_semaphore(%5 : memref<!tpu.dma_semaphore, #tpu.memory_space<semaphore_mem>>)
    %c1_i32 = arith.constant 1 : i32
    %c1_i32_6 = arith.constant 1 : i32
    %c1_i32_7 = arith.constant 1 : i32
    %c0_i32_8 = arith.constant 0 : i32
    %c0_i32_9 = arith.constant 0 : i32
    %6 = tpu.memref_slice %arg0[%c1_i32, %c0_i32_8, %c0_i32_9] : memref<2x1x1024xf32, #tpu.memory_space<any>> -> memref<1x1x1024xf32, #tpu.memory_space<any>>
    %7 = tpu.memref_squeeze %6 : memref<1x1x1024xf32, #tpu.memory_space<any>> -> memref<1x1024xf32, #tpu.memory_space<any>>
    %c0_i32_10 = arith.constant 0 : i32
    %c0_i32_11 = arith.constant 0 : i32
    %8 = tpu.memref_slice %arg1[%c1_i32_6, %c0_i32_10, %c0_i32_11] : memref<2x1x1024xf32, #tpu.memory_space<any>> -> memref<1x1x1024xf32, #tpu.memory_space<any>>
    %9 = tpu.memref_squeeze %8 : memref<1x1x1024xf32, #tpu.memory_space<any>> -> memref<1x1024xf32, #tpu.memory_space<any>>
    %10 = tpu.memref_slice %arg2[%c1_i32_7] : memref<2x!tpu.dma_semaphore, #tpu.memory_space<semaphore_mem>> -> memref<1x!tpu.dma_semaphore, #tpu.memory_space<semaphore_mem>>
    %11 = tpu.memref_squeeze %10 : memref<1x!tpu.dma_semaphore, #tpu.memory_space<semaphore_mem>> -> memref<!tpu.dma_semaphore, #tpu.memory_space<semaphore_mem>>
    tpu.enqueue_dma source(%7 : memref<1x1024xf32, #tpu.memory_space<any>>) target(%9 : memref<1x1024xf32, #tpu.memory_space<any>>) target_semaphore(%11 : memref<!tpu.dma_semaphore, #tpu.memory_space<semaphore_mem>>)
    %c0_i32_12 = arith.constant 0 : i32
    %c0_i32_13 = arith.constant 0 : i32
    %c0_i32_14 = arith.constant 0 : i32
    %c0_i32_15 = arith.constant 0 : i32
    %c0_i32_16 = arith.constant 0 : i32
    %12 = tpu.memref_slice %arg0[%c0_i32_12, %c0_i32_15, %c0_i32_16] : memref<2x1x1024xf32, #tpu.memory_space<any>> -> memref<1x1x1024xf32, #tpu.memory_space<any>>
    %13 = tpu.memref_squeeze %12 : memref<1x1x1024xf32, #tpu.memory_space<any>> -> memref<1x1024xf32, #tpu.memory_space<any>>
    %c0_i32_17 = arith.constant 0 : i32
    %c0_i32_18 = arith.constant 0 : i32
    %14 = tpu.memref_slice %arg1[%c0_i32_13, %c0_i32_17, %c0_i32_18] : memref<2x1x1024xf32, #tpu.memory_space<any>> -> memref<1x1x1024xf32, #tpu.memory_space<any>>
    %15 = tpu.memref_squeeze %14 : memref<1x1x1024xf32, #tpu.memory_space<any>> -> memref<1x1024xf32, #tpu.memory_space<any>>
    %16 = tpu.memref_slice %arg2[%c0_i32_14] : memref<2x!tpu.dma_semaphore, #tpu.memory_space<semaphore_mem>> -> memref<1x!tpu.dma_semaphore, #tpu.memory_space<semaphore_mem>>
    %17 = tpu.memref_squeeze %16 : memref<1x!tpu.dma_semaphore, #tpu.memory_space<semaphore_mem>> -> memref<!tpu.dma_semaphore, #tpu.memory_space<semaphore_mem>>
    tpu.wait_dma2 semaphore(%17 : memref<!tpu.dma_semaphore, #tpu.memory_space<semaphore_mem>>) src(%13 : memref<1x1024xf32, #tpu.memory_space<any>>) dst(%15 : memref<1x1024xf32, #tpu.memory_space<any>>)
    %c1_i32_19 = arith.constant 1 : i32
    %c1_i32_20 = arith.constant 1 : i32
    %c1_i32_21 = arith.constant 1 : i32
    %c0_i32_22 = arith.constant 0 : i32
    %c0_i32_23 = arith.constant 0 : i32
    %18 = tpu.memref_slice %arg0[%c1_i32_19, %c0_i32_22, %c0_i32_23] : memref<2x1x1024xf32, #tpu.memory_space<any>> -> memref<1x1x1024xf32, #tpu.memory_space<any>>
    %19 = tpu.memref_squeeze %18 : memref<1x1x1024xf32, #tpu.memory_space<any>> -> memref<1x1024xf32, #tpu.memory_space<any>>
    %c0_i32_24 = arith.constant 0 : i32
    %c0_i32_25 = arith.constant 0 : i32
    %20 = tpu.memref_slice %arg1[%c1_i32_20, %c0_i32_24, %c0_i32_25] : memref<2x1x1024xf32, #tpu.memory_space<any>> -> memref<1x1x1024xf32, #tpu.memory_space<any>>
    %21 = tpu.memref_squeeze %20 : memref<1x1x1024xf32, #tpu.memory_space<any>> -> memref<1x1024xf32, #tpu.memory_space<any>>
    %22 = tpu.memref_slice %arg2[%c1_i32_21] : memref<2x!tpu.dma_semaphore, #tpu.memory_space<semaphore_mem>> -> memref<1x!tpu.dma_semaphore, #tpu.memory_space<semaphore_mem>>
    %23 = tpu.memref_squeeze %22 : memref<1x!tpu.dma_semaphore, #tpu.memory_space<semaphore_mem>> -> memref<!tpu.dma_semaphore, #tpu.memory_space<semaphore_mem>>
    tpu.wait_dma2 semaphore(%23 : memref<!tpu.dma_semaphore, #tpu.memory_space<semaphore_mem>>) src(%19 : memref<1x1024xf32, #tpu.memory_space<any>>) dst(%21 : memref<1x1024xf32, #tpu.memory_space<any>>)
    return
  }
}

</mosaic_0001>

<llo_original>
// kernel: tpu_custom_call.1
$region0: #{tpu_custom_call.1}
  #allocation0 [shape = 'u32[]', space=smem, size = 0x4, offset = 0x4, fixed_abs, tag = 'smem constant byte address 0x4 - core index']
  #allocation1 [shape = 'u32[144,128]{1,0:T(1,128)}', space=vmem, size = 0x12000, scoped, tag = 'internal scratch']
  #allocation2 [shape = 's32[2]{0}', space=sflag, size = 0x8, scoped, tag = 'scratch operand']
  #allocation3 [shape = 's32[]', space=sflag, size = 0x4, offset = 0, fixed_abs, tag = 'sflag constant byte address 0x0 - dummy sync flag']
  #allocation4 [shape = 'u32[0]{0}', space=smem, size = 0, offset = 0, fixed_abs, tag = 'smem constant byte address 0x0 - null']
  #allocation5 [shape = 's32[]', space=sflag, size = 0x4, offset = 0, fixed_abs, tag = 'sflag constant byte address 0x0 - dummy sync flag']
  #allocation6 [shape = 'u32[0]{0}', space=smem, size = 0, offset = 0, fixed_abs, tag = 'smem constant byte address 0x0 - null']
  %s0 = inlined_call_operand.hbm [shape: f32[2,1,1024], index: 0, kind: input, shape index: {}]
  %s1 = inlined_call_operand.hbm [shape: f32[2,1,1024], index: 1, kind: output, shape index: {}]
  %s2 = sld [smem:[#allocation0]]
  $region2: #{tpu_custom_call.1} parent=0
    _
  %s4 = ssub.s32 1, %s2
  %s5 = scalar_select 0, %s4, %s2
  %s7 = sshll.u32 1, 14
  %s8 = sxor.u32 4294967295, %s7
  %s11 = sshll.u32 3, 24
  %s12 = sxor.u32 4294967295, %s11
  %s13 = sand.u32 0, %s12
  %s15 = sor.u32 %s13, 0
  %18 = dma.general %s0, 128, %s1, [#allocation2], [#allocation3], [#allocation4], %s15, 0
  %s19 = scalar_lea.hbm %s0, 128
  %s20 = scalar_lea.hbm %s1, 128
  %s21 = scalar_lea.sflag [#allocation2], 1
  %s23 = sshll.u32 1, 14
  %s24 = sxor.u32 4294967295, %s23
  %s27 = sshll.u32 3, 24
  %s28 = sxor.u32 4294967295, %s27
  %s29 = sand.u32 0, %s28
  %s31 = sor.u32 %s29, 0
  %34 = dma.general %s19, 128, %s20, %s21, [#allocation5], [#allocation6], %s31, 0
  %s35 = smul.u32 1, 8
  %s36 = sshll.u32 %s35, 4
  %37 = dma.done [#allocation2], %s36
  %s38 = sshll.u32 %s35, 4
  %39 = dma.done %s21, %s38
  %40 = vsyncmov [#allocation2]
  %s41 = vpop.sfrf %40
  %p42 = scmp.eq.s32.totalorder %s41, 0
  %p43 = pneg %p42
  %45 = shalt.err (%p43)
  %s46 = scalar_lea.sflag [#allocation2], 1
  %47 = vsyncmov %s46
  %s48 = vpop.sfrf %47
  %p49 = scmp.eq.s32.totalorder %s48, 0
  %p50 = pneg %p49
  %52 = shalt.err (%p50)

</llo_original>
